<compile_context>
chip_gen: v7x
topology: tpu7x:2x2x1
jax: 0.10.0
libtpu: 0.0.40
codegen_flags: <defaults>
</compile_context>

<pallas_src>
import jax
import jax.numpy as jnp
from jax.experimental import pallas as pl
from jax.experimental.pallas import tpu as pltpu

# ----------------------------- configuration ---------------------------------
D_MODEL = 32
N_HEADS = 4                      # d_model % n_heads == 0
HEAD_DIM = D_MODEL // N_HEADS    # 8
D_FF = 64                        # ff_dim of each per-head FeedForward
FF_TOTAL = N_HEADS * D_FF        # 256
DEFAULT_TM = 2048                # row tile; fits VMEM on v5e(16MiB scoped)/v6e/v7x(64MiB)


# ------------------------------- kernel ---------------------------------------
def _mhfw_kernel(x_ref, w1_ref, b1_ref, w2_ref, b2_ref, o_ref):
    """Fused multi-head feed-forward via block-diagonal matmuls.

    x_ref : (TM, D)       f32 row tile of the flattened (B*L, d_model) input
    w1_ref: (D, H*FF)     bf16, block-diagonal (exact zeros off-diagonal)
    b1_ref: (1, H*FF)     f32
    w2_ref: (H*FF, D)     bf16, block-diagonal
    b2_ref: (1, D)        f32
    o_ref : (TM, D)       f32
    """
    x = x_ref[...]
    # bf16 MXU inputs, f32 accumulation / bias / relu.
    h = jnp.dot(x.astype(jnp.bfloat16), w1_ref[...],
                preferred_element_type=jnp.float32) + b1_ref[...]
    h = jnp.maximum(h, 0.0)                       # relu (dropout = identity in eval)
    o_ref[...] = jnp.dot(h.astype(jnp.bfloat16), w2_ref[...],
                         preferred_element_type=jnp.float32) + b2_ref[...]


# ------------------------------ pallas wrapper ---------------------------------
def multihead_feedforward(x, fused, *, tm=DEFAULT_TM):
    """MultiheadFeedForward.forward (eval mode). x: (B, L, d_model) float32."""
    B, L, D = x.shape
    M = B * L
    # Clamp the row tile: never larger than the (sublane-rounded) row count, always a
    # multiple of 8 so the (8, 128) block constraint is met on the sublane axis.
    tm = max(8, min(int(tm), ((M + 7) // 8) * 8))
    grid = (pl.cdiv(M, tm),)

    cost = pl.CostEstimate(
        flops=2 * M * (D * FF_TOTAL + FF_TOTAL * D),
        transcendentals=0,
        bytes_accessed=2 * M * D * 4                       # x read + out write (f32)
        + (D * FF_TOTAL + FF_TOTAL * D) * 2                # bf16 weights
        + (FF_TOTAL + D) * 4,                              # f32 biases
    )

    out = pl.pallas_call(
        _mhfw_kernel,
        out_shape=jax.ShapeDtypeStruct((M, D), jnp.float32),
        grid=grid,
        in_specs=[
            pl.BlockSpec((tm, D), lambda i: (i, 0)),            # x rides the row grid
            pl.BlockSpec((D, FF_TOTAL), lambda i: (0, 0)),      # weights: constant block,
            pl.BlockSpec((1, FF_TOTAL), lambda i: (0, 0)),      # DMA'd once, VMEM-resident
            pl.BlockSpec((FF_TOTAL, D), lambda i: (0, 0)),
            pl.BlockSpec((1, D), lambda i: (0, 0)),
        ],
        out_specs=pl.BlockSpec((tm, D), lambda i: (i, 0)),
        compiler_params=pltpu.CompilerParams(
            dimension_semantics=("parallel",),                  # shards rows across v7x's 2 TCs
        ),
        cost_estimate=cost,
    )(x.reshape(M, D), fused["w1"], fused["b1"], fused["w2"], fused["b2"])

    return out.reshape(B, L, D)


# ------------------------------ parameters -------------------------------------
def init_params(key):
    """Canonical per-head parameters (Conv1d k=1 weights stored transposed: (in, out))."""
    ks = jax.random.split(key, 4)
    return {
        "w1": 0.1 * jax.random.normal(ks[0], (N_HEADS, HEAD_DIM, D_FF), jnp.float32),
        "b1": 0.01 * jax.random.normal(ks[1], (N_HEADS, D_FF), jnp.float32),
        "w2": 0.1 * jax.random.normal(ks[2], (N_HEADS, D_FF, HEAD_DIM), jnp.float32),
        "b2": 0.01 * jax.random.normal(ks[3], (N_HEADS, HEAD_DIM), jnp.float32),
    }


def fuse_params(p):
    """One-time constant fold: exact block-diagonal fused weights (no cross-head leakage).

    Weights are stored in bf16 (MXU-native on v5e/v6e/v7x); structural zeros stay exact.
    Biases stay f32 (added after the f32-accumulated matmul).
    """
    w1_bd = jax.scipy.linalg.block_diag(*[p["w1"][h] for h in range(N_HEADS)])  # (D, H*FF)
    w2_bd = jax.scipy.linalg.block_diag(*[p["w2"][h] for h in range(N_HEADS)])  # (H*FF, D)
    return {
        "w1": w1_bd.astype(jnp.bfloat16),
        "b1": p["b1"].reshape(1, FF_TOTAL).astype(jnp.float32),
        "w2": w2_bd.astype(jnp.bfloat16),
        "b2": p["b2"].reshape(1, D_MODEL).astype(jnp.float32),
    }


# --------------------------- pure-JAX reference --------------------------------
def reference(x, p):
    """Direct per-head translation of the PyTorch module (eval mode), full f32."""
    B, L, D = x.shape
    xh = x.reshape(B, L, N_HEADS, HEAD_DIM)
    outs = []
    for h in range(N_HEADS):
        y = jnp.einsum("ble,ef->blf", xh[:, :, h, :], p["w1"][h]) + p["b1"][h]
        y = jnp.maximum(y, 0.0)
        y = jnp.einsum("blf,fe->ble", y, p["w2"][h]) + p["b2"][h]
        outs.append(y)
    return jnp.stack(outs, axis=-2).reshape(B, L, D)


# ----------------------------------- main ---------------------------------------
if __name__ == "__main__":
    B, L = 2, 8
    key = jax.random.PRNGKey(0)
    kx, kp = jax.random.split(key)
    x = jax.random.normal(kx, (B, L, D_MODEL), jnp.float32)

    params = init_params(kp)
    fused = fuse_params(params)

    out = jax.jit(multihead_feedforward)(x, fused)
    jax.block_until_ready(out)

    assert out.shape == (B, L, D_MODEL) and out.dtype == jnp.float32
    ref = reference(x, params)
    # bf16 MXU inputs -> relaxed tolerance vs. the f32 reference.
    err = float(jnp.max(jnp.abs(out - ref)))
    assert jnp.allclose(out, ref, atol=3e-2, rtol=3e-2), err
    print("KERNEL_OK")
</pallas_src>

<mosaic_0001>
module attributes {stable_mosaic.version = 11 : i64} {
  func.func @_mhfw_kernel(%arg0: i32, %arg1: memref<16x32xf32, #tpu.memory_space<vmem>>, %arg2: memref<32x256xbf16, #tpu.memory_space<vmem>>, %arg3: memref<1x256xf32, #tpu.memory_space<vmem>>, %arg4: memref<256x32xbf16, #tpu.memory_space<vmem>>, %arg5: memref<1x32xf32, #tpu.memory_space<vmem>>, %arg6: memref<16x32xf32, #tpu.memory_space<vmem>>) attributes {dimension_semantics = [#tpu.dimension_semantics<parallel>], iteration_bounds = array<i64: 1>, scalar_prefetch = 0 : i64, scratch_operands = 0 : i64, tpu.core_type = #tpu.core_type<tc>, window_params = [{transform_indices = @transform_0, window_bounds = array<i64: 16, 32>}, {pipeline_mode = #tpu.pipeline_mode<synchronous>, transform_indices = @transform_1, window_bounds = array<i64: 32, 256>}, {pipeline_mode = #tpu.pipeline_mode<synchronous>, transform_indices = @transform_2, window_bounds = array<i64: 1, 256>}, {pipeline_mode = #tpu.pipeline_mode<synchronous>, transform_indices = @transform_3, window_bounds = array<i64: 256, 32>}, {pipeline_mode = #tpu.pipeline_mode<synchronous>, transform_indices = @transform_4, window_bounds = array<i64: 1, 32>}, {transform_indices = @transform_5, window_bounds = array<i64: 16, 32>}]} {
    %c0 = arith.constant 0 : index
    %c0_0 = arith.constant 0 : index
    %0 = vector.load %arg1[%c0, %c0_0] : memref<16x32xf32, #tpu.memory_space<vmem>>, vector<16x32xf32>
    %1 = arith.truncf %0 : vector<16x32xf32> to vector<16x32xbf16>
    %c0_1 = arith.constant 0 : index
    %c0_2 = arith.constant 0 : index
    %2 = vector.load %arg2[%c0_1, %c0_2] : memref<32x256xbf16, #tpu.memory_space<vmem>>, vector<32x256xbf16>
    %cst = arith.constant dense<0.000000e+00> : vector<16x256xf32>
    %3 = tpu.matmul %1, %2, %cst {dimension_numbers = #tpu.dot_dimension_numbers<[1], [0], [0], [1], [0, 0, 1, 1], [], []>} : vector<16x32xbf16>, vector<32x256xbf16>, vector<16x256xf32> -> vector<16x256xf32>
    %c0_3 = arith.constant 0 : index
    %c0_4 = arith.constant 0 : index
    %4 = vector.load %arg3[%c0_3, %c0_4] : memref<1x256xf32, #tpu.memory_space<vmem>>, vector<1x256xf32>
    %5 = vector.broadcast %4 : vector<1x256xf32> to vector<16x256xf32>
    %6 = arith.addf %3, %5 : vector<16x256xf32>
    %cst_5 = arith.constant 0.000000e+00 : f32
    %7 = vector.broadcast %cst_5 : f32 to vector<16x256xf32>
    %8 = arith.maximumf %6, %7 : vector<16x256xf32>
    %9 = arith.truncf %8 : vector<16x256xf32> to vector<16x256xbf16>
    %c0_6 = arith.constant 0 : index
    %c0_7 = arith.constant 0 : index
    %10 = vector.load %arg4[%c0_6, %c0_7] : memref<256x32xbf16, #tpu.memory_space<vmem>>, vector<256x32xbf16>
    %cst_8 = arith.constant dense<0.000000e+00> : vector<16x32xf32>
    %11 = tpu.matmul %9, %10, %cst_8 {dimension_numbers = #tpu.dot_dimension_numbers<[1], [0], [0], [1], [0, 0, 1, 1], [], []>} : vector<16x256xbf16>, vector<256x32xbf16>, vector<16x32xf32> -> vector<16x32xf32>
    %c0_9 = arith.constant 0 : index
    %c0_10 = arith.constant 0 : index
    %12 = vector.load %arg5[%c0_9, %c0_10] : memref<1x32xf32, #tpu.memory_space<vmem>>, vector<1x32xf32>
    %13 = vector.broadcast %12 : vector<1x32xf32> to vector<16x32xf32>
    %14 = arith.addf %11, %13 : vector<16x32xf32>
    %c0_11 = arith.constant 0 : index
    %c0_12 = arith.constant 0 : index
    %15 = vector.load %arg6[%c0_11, %c0_12] : memref<16x32xf32, #tpu.memory_space<vmem>>, vector<16x32xf32>
    tpu.vector_store %arg6[%c0_11, %c0_12], %14 {strides = array<i32>} : memref<16x32xf32, #tpu.memory_space<vmem>>, vector<16x32xf32>,
    return
  }
  func.func @transform_0(%arg0: i32) -> (i32, i32) {
    %c0_i32 = arith.constant 0 : i32
    %c0_i32_0 = arith.constant 0 : i32
    return %arg0, %c0_i32 : i32, i32
  }
  func.func @transform_1(%arg0: i32) -> (i32, i32) {
    %c0_i32 = arith.constant 0 : i32
    %c0_i32_0 = arith.constant 0 : i32
    %c0_i32_1 = arith.constant 0 : i32
    return %c0_i32, %c0_i32_0 : i32, i32
  }
  func.func @transform_2(%arg0: i32) -> (i32, i32) {
    %c0_i32 = arith.constant 0 : i32
    %c0_i32_0 = arith.constant 0 : i32
    %c0_i32_1 = arith.constant 0 : i32
    return %c0_i32, %c0_i32_0 : i32, i32
  }
  func.func @transform_3(%arg0: i32) -> (i32, i32) {
    %c0_i32 = arith.constant 0 : i32
    %c0_i32_0 = arith.constant 0 : i32
    %c0_i32_1 = arith.constant 0 : i32
    return %c0_i32, %c0_i32_0 : i32, i32
  }
  func.func @transform_4(%arg0: i32) -> (i32, i32) {
    %c0_i32 = arith.constant 0 : i32
    %c0_i32_0 = arith.constant 0 : i32
    %c0_i32_1 = arith.constant 0 : i32
    return %c0_i32, %c0_i32_0 : i32, i32
  }
  func.func @transform_5(%arg0: i32) -> (i32, i32) {
    %c0_i32 = arith.constant 0 : i32
    %c0_i32_0 = arith.constant 0 : i32
    return %arg0, %c0_i32 : i32, i32
  }
}

</mosaic_0001>

<llo_original>
// kernel: multihead_feedforward.1
$region0: #{multihead_feedforward.1}
  #allocation0 [shape = 'u32[]', space=smem, size = 0x4, offset = 0x4, fixed_abs, tag = 'smem constant byte address 0x4 - core index']
  #allocation1 [shape = 'u32[144,128]{1,0:T(1,128)}', space=vmem, size = 0x12000, scoped, tag = 'internal scratch']
  %s0 = inlined_call_operand.vmem [shape: f32[16,32], index: 0, kind: input, shape index: {}]
  %s1 = inlined_call_operand.vmem [shape: bf16[32,256], index: 1, kind: input, shape index: {}]
  %s2 = inlined_call_operand.vmem [shape: f32[1,256], index: 2, kind: input, shape index: {}]
  %s3 = inlined_call_operand.vmem [shape: bf16[256,32], index: 3, kind: input, shape index: {}]
  %s4 = inlined_call_operand.vmem [shape: f32[1,32], index: 4, kind: input, shape index: {}]
  %s5 = inlined_call_operand.hbm [shape: f32[16,32], index: 5, kind: output, shape index: {}]
  %s6 = sld [smem:[#allocation0]]
  $region30: #{multihead_feedforward.1} parent=0
    _
  %s8 = ssub.s32 1, %s6
  %s9 = scalar_select 0, %s8, %s6
  $region1: #{multihead_feedforward.1} parent=0
    #allocation2 [shape = 'u8[8192]{0}', space=vmem, size = 0x2000, scoped, tag = 'output window, operand 0, single buffered']
    #allocation3 [shape = 's32[1]{0}', space=sflag, size = 0x4, scoped, tag = 'scoped memory for multihead_feedforward.1']
    %10 = vsyncpa [#allocation3], 0
    // Predicated region
    $region2: #{multihead_feedforward.1} parent=1 // pred_check
      _
    $region3: #{multihead_feedforward.1} parent=1 // pred_check_branch
      %12 = sbr.rel (0) target = $region5
    $region4: #{multihead_feedforward.1} parent=1 // pred_region
      _
    $region5: #{multihead_feedforward.1} parent=1 // pred_fallthru
      _
    // Predicated region
    $region6: #{multihead_feedforward.1} parent=1 // pred_check
      _
    $region7: #{multihead_feedforward.1} parent=1 // pred_check_branch
      %14 = sbr.rel (0) target = $region9
    $region8: #{multihead_feedforward.1} parent=1 // pred_region
      _
    $region9: #{multihead_feedforward.1} parent=1 // pred_fallthru
      _
    // Predicated region
    $region10: #{multihead_feedforward.1} parent=1 // pred_check
      _
    $region11: #{multihead_feedforward.1} parent=1 // pred_check_branch
      %16 = sbr.rel (0) target = $region13
    $region12: #{multihead_feedforward.1} parent=1 // pred_region
      _
    $region13: #{multihead_feedforward.1} parent=1 // pred_fallthru
      _
    // Predicated region
    $region14: #{multihead_feedforward.1} parent=1 // pred_check
      _
    $region15: #{multihead_feedforward.1} parent=1 // pred_check_branch
      %18 = sbr.rel (0) target = $region17
    $region16: #{multihead_feedforward.1} parent=1 // pred_region
      _
    $region17: #{multihead_feedforward.1} parent=1 // pred_fallthru
      _
    // Predicated region
    $region18: #{multihead_feedforward.1} parent=1 // pred_check
      _
    $region19: #{multihead_feedforward.1} parent=1 // pred_check_branch
      %20 = sbr.rel (0) target = $region21
    $region20: #{multihead_feedforward.1} parent=1 // pred_region
      _
    $region21: #{multihead_feedforward.1} parent=1 // pred_fallthru
      _
    %v22 = vld [vmem:[%s0] sm:$0xff]
    %v23 = vld [vmem:[%s0 + $0x8] sm:$0xff]
    %v24 = vpack.c.bf16 %v23, %v22
    %v25 = vld [vmem:[%s1] sm:$0xff]
    %v26 = vld [vmem:[%s1 + $0x8] sm:$0xff]
    %v27 = vld [vmem:[%s1 + $0x10] sm:$0xff]
    %v28 = vld [vmem:[%s1 + $0x18] sm:$0xff]
    %v29 = vld [vmem:[%s2] sm:$0x3]
    %v31 = vlaneseq
    %v32 = vshrl.u32 %v31, 7
    %v33 = vsub.s32 0, %v32
    %v34 = vrot.slane %v29, %v33
    %v35 = vlaneseq
    %v36 = vshrl.u32 %v35, 7
    %v37 = vsub.s32 1, %v36
    %v38 = vrot.slane %v29, %v37
    %v45 = vunpack.c.l.b16 %v25
    %v46 = vunpack.c.h.b16 %v25
    %v47 = vunpack.c.l.b16 %v26
    %v48 = vunpack.c.h.b16 %v26
    %v49 = vunpack.c.l.b16 %v27
    %v50 = vunpack.c.h.b16 %v27
    %v51 = vunpack.c.l.b16 %v28
    %v52 = vunpack.c.h.b16 %v28
    %v53 = vpack.c.b16 %v47, %v45
    %v54 = vpack.c.b16 %v48, %v46
    %v55 = vpack.c.b16 %v51, %v49
    %v56 = vpack.c.b16 %v52, %v50
    %vm61 = vcmask 261120
    %v63 = vsel %vm61, %v24, 0
    %65 = vmatprep.subr.bf16.mxu0 %v54
    %66 = vmatpush1.bf16.msra.mxu0 %v53
    %67 = vmatprep.subr.bf16.mxu0 %v56
    %68 = vmatpush1.bf16.msra.mxu0 %v55
    %69 = vmatprep.subr.bf16.mxu0 0
    %70 = vmatpush1.bf16.msra.mxu0 0
    %71 = vmatprep.subr.bf16.mxu0 0
    %72 = vmatpush1.bf16.msra.mxu0 0
    %73 = vmatprep.subr.bf16.mxu0 0
    %74 = vmatpush1.bf16.msra.mxu0 0
    %75 = vmatprep.subr.bf16.mxu0 0
    %76 = vmatpush1.bf16.msra.mxu0 0
    %77 = vmatprep.subr.bf16.mxu0 0
    %78 = vmatpush1.bf16.msra.mxu0 0
    %79 = vmatprep.subr.bf16.mxu0 0
    %80 = vmatpush1.bf16.msra.mxu0 0
    %81 = vmatprep.subr.bf16.mxu0 0
    %82 = vmatpush1.bf16.msra.mxu0 0
    %83 = vmatprep.subr.bf16.mxu0 0
    %84 = vmatpush1.bf16.msra.mxu0 0
    %85 = vmatprep.subr.bf16.mxu0 0
    %86 = vmatpush1.bf16.msra.mxu0 0
    %87 = vmatprep.subr.bf16.mxu0 0
    %88 = vmatpush1.bf16.msra.mxu0 0
    %89 = vmatprep.subr.bf16.mxu0 0
    %90 = vmatpush1.bf16.msra.mxu0 0
    %91 = vmatprep.subr.bf16.mxu0 0
    %92 = vmatpush1.bf16.msra.mxu0 0
    %93 = vmatprep.subr.bf16.mxu0 0
    %94 = vmatpush1.bf16.msra.mxu0 0
    %95 = vmatprep.subr.bf16.mxu0 0
    %96 = vmatpush1.bf16.msra.mxu0 0
    %97 = vmatprep.mubr.bf16.mxu0 0
    %98 = vmatmul.mubr.bf16.gmra.mrb[0].mxu0 %v63
    %v99 = vpop.f32.mrb[0].mxu0
    %v100 = vadd.f32 %v34, %v99
    %v101 = vpop.f32.mrb[0].mxu0
    %v102 = vadd.f32 %v38, %v101
    %v103 = vpop.f32.mrb[0].mxu0
    %v104 = vadd.f32 %v34, %v103
    %v105 = vpop.f32.mrb[0].mxu0
    %v106 = vadd.f32 %v38, %v105
    %107 = vdwg.mxu0
    %v108 = vmax.f32 %v100, 0.0
    %v109 = vmax.f32 %v102, 0.0
    %v110 = vmax.f32 %v104, 0.0
    %v111 = vmax.f32 %v106, 0.0
    %v112 = vpack.c.bf16 %v110, %v108
    %v113 = vpack.c.bf16 %v111, %v109
    %v114 = vld [vmem:[%s3] sm:$0xf]
    %v115 = vld [vmem:[%s3 + $0x4] sm:$0xf]
    %v116 = vld [vmem:[%s3 + $0x8] sm:$0xf]
    %v117 = vld [vmem:[%s3 + $0xc] sm:$0xf]
    %v118 = vld [vmem:[%s3 + $0x10] sm:$0xf]
    %v119 = vld [vmem:[%s3 + $0x14] sm:$0xf]
    %v120 = vld [vmem:[%s3 + $0x18] sm:$0xf]
    %v121 = vld [vmem:[%s3 + $0x1c] sm:$0xf]
    %v122 = vld [vmem:[%s3 + $0x20] sm:$0xf]
    %v123 = vld [vmem:[%s3 + $0x24] sm:$0xf]
    %v124 = vld [vmem:[%s3 + $0x28] sm:$0xf]
    %v125 = vld [vmem:[%s3 + $0x2c] sm:$0xf]
    %v126 = vld [vmem:[%s3 + $0x30] sm:$0xf]
    %v127 = vld [vmem:[%s3 + $0x34] sm:$0xf]
    %v128 = vld [vmem:[%s3 + $0x38] sm:$0xf]
    %v129 = vld [vmem:[%s3 + $0x3c] sm:$0xf]
    %v130 = vld [vmem:[%s3 + $0x40] sm:$0xf]
    %v131 = vld [vmem:[%s3 + $0x44] sm:$0xf]
    %v132 = vld [vmem:[%s3 + $0x48] sm:$0xf]
    %v133 = vld [vmem:[%s3 + $0x4c] sm:$0xf]
    %v134 = vld [vmem:[%s3 + $0x50] sm:$0xf]
    %v135 = vld [vmem:[%s3 + $0x54] sm:$0xf]
    %v136 = vld [vmem:[%s3 + $0x58] sm:$0xf]
    %v137 = vld [vmem:[%s3 + $0x5c] sm:$0xf]
    %v138 = vld [vmem:[%s3 + $0x60] sm:$0xf]
    %v139 = vld [vmem:[%s3 + $0x64] sm:$0xf]
    %v140 = vld [vmem:[%s3 + $0x68] sm:$0xf]
    %v141 = vld [vmem:[%s3 + $0x6c] sm:$0xf]
    %v142 = vld [vmem:[%s3 + $0x70] sm:$0xf]
    %v143 = vld [vmem:[%s3 + $0x74] sm:$0xf]
    %v144 = vld [vmem:[%s3 + $0x78] sm:$0xf]
    %v145 = vld [vmem:[%s3 + $0x7c] sm:$0xf]
    %v146 = vld [vmem:[%s4] sm:$0x1]
    %v148 = vlaneseq
    %v149 = vshrl.u32 %v148, 7
    %v150 = vsub.s32 0, %v149
    %v151 = vrot.slane %v146, %v150
    %v185 = vunpack.c.l.b16 %v114
    %v186 = vunpack.c.l.b16 %v115
    %v187 = vunpack.c.l.b16 %v116
    %v188 = vunpack.c.l.b16 %v117
    %v189 = vunpack.c.l.b16 %v118
    %v190 = vunpack.c.l.b16 %v119
    %v191 = vunpack.c.l.b16 %v120
    %v192 = vunpack.c.l.b16 %v121
    %v193 = vunpack.c.l.b16 %v122
    %v194 = vunpack.c.l.b16 %v123
    %v195 = vunpack.c.l.b16 %v124
    %v196 = vunpack.c.l.b16 %v125
    %v197 = vunpack.c.l.b16 %v126
    %v198 = vunpack.c.l.b16 %v127
    %v199 = vunpack.c.l.b16 %v128
    %v200 = vunpack.c.l.b16 %v129
    %v201 = vunpack.c.l.b16 %v130
    %v202 = vunpack.c.l.b16 %v131
    %v203 = vunpack.c.l.b16 %v132
    %v204 = vunpack.c.l.b16 %v133
    %v205 = vunpack.c.l.b16 %v134
    %v206 = vunpack.c.l.b16 %v135
    %v207 = vunpack.c.l.b16 %v136
    %v208 = vunpack.c.l.b16 %v137
    %v209 = vunpack.c.l.b16 %v138
    %v210 = vunpack.c.l.b16 %v139
    %v211 = vunpack.c.l.b16 %v140
    %v212 = vunpack.c.l.b16 %v141
    %v213 = vunpack.c.l.b16 %v142
    %v214 = vunpack.c.l.b16 %v143
    %v215 = vunpack.c.l.b16 %v144
    %v216 = vunpack.c.l.b16 %v145
    %v217 = vpack.c.b16 %v186, %v185
    %v218 = vpack.c.b16 %v188, %v187
    %v219 = vpack.c.b16 %v190, %v189
    %v220 = vpack.c.b16 %v192, %v191
    %v221 = vpack.c.b16 %v194, %v193
    %v222 = vpack.c.b16 %v196, %v195
    %v223 = vpack.c.b16 %v198, %v197
    %v224 = vpack.c.b16 %v200, %v199
    %v225 = vpack.c.b16 %v202, %v201
    %v226 = vpack.c.b16 %v204, %v203
    %v227 = vpack.c.b16 %v206, %v205
    %v228 = vpack.c.b16 %v208, %v207
    %v229 = vpack.c.b16 %v210, %v209
    %v230 = vpack.c.b16 %v212, %v211
    %v231 = vpack.c.b16 %v214, %v213
    %v232 = vpack.c.b16 %v216, %v215
    %249 = vmatprep.subr.bf16.mxu0 0
    %250 = vmatpush1.bf16.msra.mxu0 %v217
    %251 = vmatprep.subr.bf16.mxu0 0
    %252 = vmatpush1.bf16.msra.mxu0 %v218
    %253 = vmatprep.subr.bf16.mxu0 0
    %254 = vmatpush1.bf16.msra.mxu0 %v219
    %255 = vmatprep.subr.bf16.mxu0 0
    %256 = vmatpush1.bf16.msra.mxu0 %v220
    %257 = vmatprep.subr.bf16.mxu0 0
    %258 = vmatpush1.bf16.msra.mxu0 %v221
    %259 = vmatprep.subr.bf16.mxu0 0
    %260 = vmatpush1.bf16.msra.mxu0 %v222
    %261 = vmatprep.subr.bf16.mxu0 0
    %262 = vmatpush1.bf16.msra.mxu0 %v223
    %263 = vmatprep.subr.bf16.mxu0 0
    %264 = vmatpush1.bf16.msra.mxu0 %v224
    %265 = vmatprep.subr.bf16.mxu0 0
    %266 = vmatpush1.bf16.msra.mxu0 %v225
    %267 = vmatprep.subr.bf16.mxu0 0
    %268 = vmatpush1.bf16.msra.mxu0 %v226
    %269 = vmatprep.subr.bf16.mxu0 0
    %270 = vmatpush1.bf16.msra.mxu0 %v227
    %271 = vmatprep.subr.bf16.mxu0 0
    %272 = vmatpush1.bf16.msra.mxu0 %v228
    %273 = vmatprep.subr.bf16.mxu0 0
    %274 = vmatpush1.bf16.msra.mxu0 %v229
    %275 = vmatprep.subr.bf16.mxu0 0
    %276 = vmatpush1.bf16.msra.mxu0 %v230
    %277 = vmatprep.subr.bf16.mxu0 0
    %278 = vmatpush1.bf16.msra.mxu0 %v231
    %279 = vmatprep.subr.bf16.mxu0 0
    %280 = vmatpush1.bf16.msra.mxu0 %v232
    %281 = vmatprep.mubr.bf16.mxu0 %v113
    %282 = vmatmul.mubr.bf16.gmra.mrb[0].mxu0 %v112
    %v283 = vpop.f32.mrb[0].mxu0
    %v284 = vadd.f32 %v151, %v283
    %v285 = vpop.f32.mrb[0].mxu0
    %v286 = vpop.f32.mrb[0].mxu0
    %v287 = vadd.f32 %v151, %v286
    %v288 = vpop.f32.mrb[0].mxu0
    %289 = vdwg.mxu0
    %290 = vst.msk [vmem:[#allocation2] sm:$0xff] %vm61, %v284
    %291 = vst.msk [vmem:[#allocation2 + $0x8] sm:$0xff] %vm61, %v287
    // Predicated region
    $region22: #{multihead_feedforward.1} parent=1 // pred_check
      _
    $region23: #{multihead_feedforward.1} parent=1 // pred_check_branch
      %293 = sbr.rel (0) target = $region25
    $region24: #{multihead_feedforward.1} parent=1 // pred_region
      %s295 = ssub.s32 256, 256
      %296 = vsyncadd [#allocation3], %s295
      %s297 = sshll.u32 [#allocation2], 4
      %s298 = int_to_ptr.vmem [resolvable:$true] %s297
      %303 = dma.vmem_to_hbm [thread:$0]  %s298, 256, %s5, [#allocation3], 128, 128, 8
    $region25: #{multihead_feedforward.1} parent=1 // pred_fallthru
      _
    // Predicated region
    $region26: #{multihead_feedforward.1} parent=1 // pred_check
      _
    $region27: #{multihead_feedforward.1} parent=1 // pred_check_branch
      %305 = sbr.rel (0) target = $region29
    $region28: #{multihead_feedforward.1} parent=1 // pred_region
      %306 = dma.done [#allocation3], 256
    $region29: #{multihead_feedforward.1} parent=1 // pred_fallthru
      _
    %307 = vsyncpa [#allocation3], 1

</llo_original>
